<compile_context>
chip_gen: v6e
topology: v6e:2x2x1
jax: 0.10.0
libtpu: 0.0.40
codegen_flags: <defaults>
</compile_context>

<pallas_src>
import jax
import jax.numpy as jnp
from jax.experimental import pallas as pl
from jax.experimental.pallas import tpu as pltpu


def _round_up(x, m):
    return ((x + m - 1) // m) * m


def _pwdp_kernel(x_ref, k_ref, o_ref):
    # x_ref: (c, tile_hw), k_ref: (cout, c), o_ref: (cout, tile_hw)
    acc = jnp.dot(k_ref[...], x_ref[...], preferred_element_type=jnp.float32)
    o_ref[...] = acc.astype(o_ref.dtype)


def _vmem_budget_bytes():
    """Generation-aware VMEM budget: ~half of physical capacity."""
    try:
        cap = pltpu.get_tpu_info().vmem_capacity_bytes
    except Exception:
        cap = 64 * 1024 * 1024  # conservative (v7x-sized) fallback
    # v5e/v6e (128 MiB) -> 64 MiB budget; v7x (64 MiB) -> 32 MiB budget.
    return min(cap // 2, 64 * 1024 * 1024)


def pixel_wise_dot_product(x, K, *, tile_hw=8192, out_dtype=None):
    """x: (n, c, h, w), K: (n, cout, c) -> (n, cout, h, w)."""
    n, c, h, w = x.shape
    _, cout, ck = K.shape
    assert c == ck, (
        "Number of channels in x and Embedding dimension (at dim 2) of K matrix must match"
    )

    hw = h * w
    if out_dtype is None:
        out_dtype = jnp.result_type(x.dtype, K.dtype)

    in_bytes = jnp.dtype(x.dtype).itemsize
    k_bytes = jnp.dtype(K.dtype).itemsize
    out_bytes = jnp.dtype(out_dtype).itemsize

    # Pad the flattened pixel axis to a multiple of 128 so the output slab is
    # lane-dense (no masked partial stores); pad is sliced off afterwards.
    hw_pad = _round_up(hw, 128)
    x_flat = x.reshape(n, c, hw)
    if hw_pad != hw:
        x_flat = jnp.pad(x_flat, ((0, 0), (0, 0), (0, hw_pad - hw)))

    # ---- Generation-aware tile sizing / VMEM budget ----
    budget = _vmem_budget_bytes()
    fixed = 2 * cout * c * k_bytes                       # double-buffered K
    per_px = 2 * (c * in_bytes + cout * out_bytes)       # double-buffered x + out
    margin = 2 * 1024 * 1024                             # compiler scratch headroom
    max_tile = max(128, ((budget - fixed - margin) // max(per_px, 1)) // 128 * 128)

    tile_hw = max(128, min(_round_up(tile_hw, 128), hw_pad, max_tile))
    num_tiles = pl.cdiv(hw_pad, tile_hw)

    needed = fixed + per_px * tile_hw + margin
    vmem_limit = int(min(max(needed, 16 * 1024 * 1024), budget))

    cost = pl.CostEstimate(
        flops=2 * n * cout * c * hw_pad,
        bytes_accessed=(
            n * c * hw_pad * in_bytes
            + n * cout * c * k_bytes
            + n * cout * hw_pad * out_bytes
        ),
        transcendentals=0,
    )

    # Grid: pixel-tile axis leading so the megacore / 2-TC parallel split falls
    # on the axis that actually has many steps (batch is typically 1-2).
    out_flat = pl.pallas_call(
        _pwdp_kernel,
        out_shape=jax.ShapeDtypeStruct((n, cout, hw_pad), out_dtype),
        grid_spec=pltpu.PrefetchScalarGridSpec(
            num_scalar_prefetch=0,
            grid=(num_tiles, n),
            in_specs=[
                # x: per-batch, per-pixel-tile block; kernel sees (c, tile_hw)
                pl.BlockSpec((None, c, tile_hw), lambda t, b: (b, 0, t)),
                # K: per-batch only; (cout, c) -- small, cheap to re-fetch
                pl.BlockSpec((None, cout, c), lambda t, b: (b, 0, 0)),
            ],
            out_specs=pl.BlockSpec((None, cout, tile_hw), lambda t, b: (b, 0, t)),
        ),
        compiler_params=pltpu.CompilerParams(
            dimension_semantics=("parallel", "parallel"),
            vmem_limit_bytes=vmem_limit,
        ),
        cost_estimate=cost,
    )(x_flat, K)

    if hw_pad != hw:
        out_flat = out_flat[:, :, :hw]
    return out_flat.reshape(n, cout, h, w)


if __name__ == "__main__":
    key = jax.random.PRNGKey(0)
    kx, kk = jax.random.split(key)

    n, c, h, w = 2, 32, 16, 16
    cout = 16

    x = jax.random.normal(kx, (n, c, h, w), dtype=jnp.float32)
    K = jax.random.normal(kk, (n, cout, c), dtype=jnp.float32)
    ref = jnp.einsum("nkc,nchw->nkhw", K, x)

    # Default path (f32 in, f32 out, single hw tile at this toy size).
    out = pixel_wise_dot_product(x, K)
    jax.block_until_ready(out)
    assert out.shape == (n, cout, h, w)
    assert jnp.allclose(out, ref, atol=1e-3, rtol=1e-3)

    # Multi-tile grid (hw=256 -> 2 tiles of 128) exercising the (tile, batch)
    # grid order and the per-step K re-fetch path.
    out2 = pixel_wise_dot_product(x, K, tile_hw=128)
    jax.block_until_ready(out2)
    assert jnp.allclose(out2, ref, atol=1e-3, rtol=1e-3)

    # Ragged pixel count (h*w = 120) -> pad-to-128 + slice-off path.
    x3 = jax.random.normal(kx, (n, c, 10, 12), dtype=jnp.float32)
    ref3 = jnp.einsum("nkc,nchw->nkhw", K, x3)
    out3 = pixel_wise_dot_product(x3, K)
    jax.block_until_ready(out3)
    assert out3.shape == (n, cout, 10, 12)
    assert jnp.allclose(out3, ref3, atol=1e-3, rtol=1e-3)

    # bf16 output knob (cuts the dominant f32 writeback when downstream allows).
    out4 = pixel_wise_dot_product(x, K, out_dtype=jnp.bfloat16)
    jax.block_until_ready(out4)
    assert out4.dtype == jnp.bfloat16
    assert jnp.allclose(out4.astype(jnp.float32), ref, atol=1e-2, rtol=2e-2)

    print("KERNEL_OK")
</pallas_src>

<mosaic_0001>
module attributes {stable_mosaic.version = 11 : i64} {
  func.func @_pwdp_kernel(%arg0: i32, %arg1: i32, %arg2: memref<1x32x256xf32, #tpu.memory_space<vmem>>, %arg3: memref<1x16x32xf32, #tpu.memory_space<vmem>>, %arg4: memref<1x16x256xf32, #tpu.memory_space<vmem>>) attributes {dimension_semantics = [#tpu.dimension_semantics<parallel>, #tpu.dimension_semantics<parallel>], iteration_bounds = array<i64: 1, 2>, scalar_prefetch = 0 : i64, scratch_operands = 0 : i64, tpu.core_type = #tpu.core_type<tc>, window_params = [{transform_indices = @transform_0, window_bounds = array<i64: 1, 32, 256>}, {transform_indices = @transform_1, window_bounds = array<i64: 1, 16, 32>}, {transform_indices = @transform_2, window_bounds = array<i64: 1, 16, 256>}]} {
    %c0 = arith.constant 0 : index
    %c0_0 = arith.constant 0 : index
    %c0_1 = arith.constant 0 : index
    %0 = vector.load %arg3[%c0, %c0_0, %c0_1] : memref<1x16x32xf32, #tpu.memory_space<vmem>>, vector<1x16x32xf32>
    %1 = vector.shape_cast %0 : vector<1x16x32xf32> to vector<16x32xf32>
    %c0_2 = arith.constant 0 : index
    %c0_3 = arith.constant 0 : index
    %c0_4 = arith.constant 0 : index
    %2 = vector.load %arg2[%c0_2, %c0_3, %c0_4] : memref<1x32x256xf32, #tpu.memory_space<vmem>>, vector<1x32x256xf32>
    %3 = vector.shape_cast %2 : vector<1x32x256xf32> to vector<32x256xf32>
    %cst = arith.constant dense<0.000000e+00> : vector<16x256xf32>
    %4 = tpu.matmul %1, %3, %cst {dimension_numbers = #tpu.dot_dimension_numbers<[1], [0], [0], [1], [0, 0, 1, 1], [], []>} : vector<16x32xf32>, vector<32x256xf32>, vector<16x256xf32> -> vector<16x256xf32>
    %c0_5 = arith.constant 0 : index
    %c0_6 = arith.constant 0 : index
    %c0_7 = arith.constant 0 : index
    %5 = vector.load %arg4[%c0_5, %c0_6, %c0_7] : memref<1x16x256xf32, #tpu.memory_space<vmem>>, vector<1x16x256xf32>
    %6 = vector.shape_cast %5 : vector<1x16x256xf32> to vector<16x256xf32>
    %7 = vector.shape_cast %4 : vector<16x256xf32> to vector<1x16x256xf32>
    tpu.vector_store %arg4[%c0_5, %c0_6, %c0_7], %7 {strides = array<i32>} : memref<1x16x256xf32, #tpu.memory_space<vmem>>, vector<1x16x256xf32>,
    return
  }
  func.func @transform_0(%arg0: i32, %arg1: i32) -> (i32, i32, i32) {
    %c0_i32 = arith.constant 0 : i32
    %c0_i32_0 = arith.constant 0 : i32
    return %arg1, %c0_i32, %arg0 : i32, i32, i32
  }
  func.func @transform_1(%arg0: i32, %arg1: i32) -> (i32, i32, i32) {
    %c0_i32 = arith.constant 0 : i32
    %c0_i32_0 = arith.constant 0 : i32
    %c0_i32_1 = arith.constant 0 : i32
    return %arg1, %c0_i32, %c0_i32_0 : i32, i32, i32
  }
  func.func @transform_2(%arg0: i32, %arg1: i32) -> (i32, i32, i32) {
    %c0_i32 = arith.constant 0 : i32
    %c0_i32_0 = arith.constant 0 : i32
    return %arg1, %c0_i32, %arg0 : i32, i32, i32
  }
}

</mosaic_0001>

<llo_original>
// kernel: tpu_custom_call.1
$region0: #{tpu_custom_call.1}
  #allocation0 [shape = 'u32[]', space=smem, size = 0x4, offset = 0x4, fixed_abs, tag = 'smem constant byte address 0x4 - core index']
  #allocation1 [shape = 'u32[144,128]{1,0:T(1,128)}', space=vmem, size = 0x12000, scoped, tag = 'internal scratch']
  %s0 = inlined_call_operand.hbm [shape: f32[2,32,256], index: 0, kind: input, shape index: {}]
  %s1 = inlined_call_operand.hbm [shape: f32[2,16,32], index: 1, kind: input, shape index: {}]
  %s2 = inlined_call_operand.hbm [shape: f32[2,16,256], index: 2, kind: output, shape index: {}]
  %s3 = sld [smem:[#allocation0]]
  $region49: #{tpu_custom_call.1} parent=0
    _
  %s5 = ssub.s32 1, %s3
  %s6 = scalar_select 0, %s5, %s3
  $region1: #{tpu_custom_call.1} parent=0
    #allocation2 [shape = 'u8[65536]{0}', space=vmem, size = 0x10000, scoped, tag = 'input window, operand 0']
    #allocation3 [shape = 's32[2]{0}', space=sflag, size = 0x8, scoped, tag = 'scoped memory for tpu_custom_call.1']
    #allocation4 [shape = 's32[2]{0}', space=sflag, size = 0x8, scoped, tag = 'scoped memory for tpu_custom_call.1']
    #allocation5 [shape = 'u8[16384]{0}', space=vmem, size = 0x4000, scoped, tag = 'input window, operand 1']
    #allocation6 [shape = 's32[2]{0}', space=sflag, size = 0x8, scoped, tag = 'scoped memory for tpu_custom_call.1']
    #allocation7 [shape = 'u8[32768]{0}', space=vmem, size = 0x8000, scoped, tag = 'output window, operand 0']
    %7 = vsyncpa [#allocation3], 0
    %s8 = scalar_lea.sflag [#allocation3], 1
    %9 = vsyncpa %s8, 0
    %10 = vsyncpa [#allocation6], 0
    %s11 = scalar_lea.sflag [#allocation6], 1
    %12 = vsyncpa %s11, 0
    %13 = vsyncpa [#allocation4], 0
    %s14 = scalar_lea.sflag [#allocation4], 1
    %15 = vsyncpa %s14, 0
    loop: start=0, step=1, limit=4
    $region2: #{tpu_custom_call.1} parent=1 // loop_pre_header
      _
    $region3: #{tpu_custom_call.1} parent=1 // loop_header
      %s17 = sphi 0, %s21
      %p18 = scmp.ge.s32.totalorder %s17, 4
      %s24 = sphi 0, %s36
      %s25 = sphi 0, %s32
      %s26 = sphi 0, %s24
      %s27 = sphi 0, %s25
      %s28 = sphi 0, %s26
      %s29 = sphi 0, %s27
      %s41 = sphi 0, %s43
      %s44 = sphi 0, %s41
      %s45 = sphi 0, %s44
      %s61 = sphi 0, %s45
      %s67 = sphi 0, %s69
      %s70 = sphi 0, %s67
      %s71 = sphi 0, %s70
      %s87 = sphi 0, %s71
      %s95 = sphi 0, %s97
      %s98 = sphi 0, %s95
      %s99 = sphi 0, %s98
      %s115 = sphi 0, %s99
    $region4: #{tpu_custom_call.1} parent=1 // loop_header_branch
      %20 = sbr.rel (%p18) target = $region8
    $region5: #{tpu_custom_call.1} parent=1 // loop_body
      %s22 = ssub.s32 %s17, 1
      %s23 = ssub.s32 %s17, 2
      %s30 = sadd.s32 1, %s25
      %p31 = scmp.ge.s32.totalorder %s30, 2
      %s32 = scalar_select %p31, 0, %s30
      %s33 = sadd.s32 1, %s24
      %s34 = scalar_select %p31, %s33, %s24
      %p35 = scmp.ge.s32.totalorder %s34, 1
      %s36 = scalar_select %p35, 0, %s34
      %s37 = ssub.s32 %s25, %s32
      %s38 = ssub.s32 %s24, %s36
      %s39 = sor.u32 %s37, %s38
      %p40 = scmp.eq.s32.totalorder %s39, 0
      %s42 = sadd.s32 %s41, 1
      %s43 = scalar_select %p40, %s41, %s42
      %p46 = pneg %p40
      %p47 = scmp.eq.s32.totalorder %s17, 1
      %p48 = por %p46, %p47
      %p49 = scmp.ne.s32.totalorder %s41, %s44
      %p50 = scmp.eq.s32.totalorder %s17, 0
      %p51 = por %p49, %p50
      %p52 = scmp.ne.s32.totalorder %s41, %s44
      %p53 = scmp.eq.s32.totalorder %s22, 1
      %p54 = por %p52, %p53
      %p55 = scmp.ne.s32.totalorder %s44, %s45
      %p56 = scmp.eq.s32.totalorder %s22, 0
      %p57 = por %p55, %p56
      %p58 = scmp.ne.s32.totalorder %s44, %s45
      %p59 = scmp.eq.s32.totalorder %s23, 1
      %p60 = por %p58, %p59
      %p62 = scmp.ne.s32.totalorder %s45, %s61
      %p63 = scmp.eq.s32.totalorder %s23, 0
      %p64 = por %p62, %p63
      %s65 = ssub.s32 %s25, %s32
      %p66 = scmp.eq.s32.totalorder %s65, 0
      %s68 = sadd.s32 %s67, 1
      %s69 = scalar_select %p66, %s67, %s68
      %p72 = pneg %p66
      %p73 = scmp.eq.s32.totalorder %s17, 1
      %p74 = por %p72, %p73
      %p75 = scmp.ne.s32.totalorder %s67, %s70
      %p76 = scmp.eq.s32.totalorder %s17, 0
      %p77 = por %p75, %p76
      %p78 = scmp.ne.s32.totalorder %s67, %s70
      %p79 = scmp.eq.s32.totalorder %s22, 1
      %p80 = por %p78, %p79
      %p81 = scmp.ne.s32.totalorder %s70, %s71
      %p82 = scmp.eq.s32.totalorder %s22, 0
      %p83 = por %p81, %p82
      %p84 = scmp.ne.s32.totalorder %s70, %s71
      %p85 = scmp.eq.s32.totalorder %s23, 1
      %p86 = por %p84, %p85
      %p88 = scmp.ne.s32.totalorder %s71, %s87
      %p89 = scmp.eq.s32.totalorder %s23, 0
      %p90 = por %p88, %p89
      %s91 = ssub.s32 %s25, %s32
      %s92 = ssub.s32 %s24, %s36
      %s93 = sor.u32 %s91, %s92
      %p94 = scmp.eq.s32.totalorder %s93, 0
      %s96 = sadd.s32 %s95, 1
      %s97 = scalar_select %p94, %s95, %s96
      %p100 = pneg %p94
      %p101 = scmp.eq.s32.totalorder %s17, 1
      %p102 = por %p100, %p101
      %p103 = scmp.ne.s32.totalorder %s95, %s98
      %p104 = scmp.eq.s32.totalorder %s17, 0
      %p105 = por %p103, %p104
      %p106 = scmp.ne.s32.totalorder %s95, %s98
      %p107 = scmp.eq.s32.totalorder %s22, 1
      %p108 = por %p106, %p107
      %p109 = scmp.ne.s32.totalorder %s98, %s99
      %p110 = scmp.eq.s32.totalorder %s22, 0
      %p111 = por %p109, %p110
      %p112 = scmp.ne.s32.totalorder %s98, %s99
      %p113 = scmp.eq.s32.totalorder %s23, 1
      %p114 = por %p112, %p113
      %p116 = scmp.ne.s32.totalorder %s99, %s115
      %p117 = scmp.eq.s32.totalorder %s23, 0
      %p118 = por %p116, %p117
      %p119 = scmp.le.s32.totalorder 1, %s17
      %p120 = scmp.lt.s32.totalorder %s17, 3
      %p121 = pnand %p119, %p120
      %p122 = pneg %p121
      // Predicated region
      $region9: #{tpu_custom_call.1} parent=5 // pred_check
        _
      $region10: #{tpu_custom_call.1} parent=5 // pred_check_branch
        %124 = sbr.rel (%p121) target = $region12
      $region11: #{tpu_custom_call.1} parent=5 // pred_region
        %s125 = ssub.s32 %s17, 1
      $region12: #{tpu_custom_call.1} parent=5 // pred_fallthru
        _
      %p126 = scmp.lt.s32.totalorder %s17, 2
      // Predicated region
      $region13: #{tpu_custom_call.1} parent=5 // pred_check
        %p127 = pneg %p126
      $region14: #{tpu_custom_call.1} parent=5 // pred_check_branch
        %129 = sbr.rel (%p127) target = $region16
      $region15: #{tpu_custom_call.1} parent=5 // pred_region
        // Predicated region
        $region17: #{tpu_custom_call.1} parent=15 // pred_check
          %p130 = pneg %p51
        $region18: #{tpu_custom_call.1} parent=15 // pred_check_branch
          %132 = sbr.rel (%p130) target = $region20
        $region19: #{tpu_custom_call.1} parent=15 // pred_region
          %s133 = sand.u32 %s41, 1
          %s134 = scalar_lea.sflag [#allocation3], %s133
          %s135 = sand.u32 %s41, 1
          %s136 = smul.addr %s135, 64
          %s137 = scalar_lea.vmem [#allocation2], %s136
          %s138 = smul.u32 2, %s24
          %s140 = ssub.s32 1024, 1024
          %141 = vsyncadd %s134, %s140
          %s142 = smul.addr %s25, 8
          %s143 = sadd.s32 %s138, %s142
          %s144 = smul.addr %s143, 128
          %s145 = scalar_lea.hbm %s0, %s144
          %s146 = sshll.u32 %s137, 4
          %s147 = int_to_ptr.vmem [resolvable:$true] %s146
          %152 = dma.hbm_to_vmem [thread:$0]  %s145, 1024, %s147, %s134, 256, 256, 16
        $region20: #{tpu_custom_call.1} parent=15 // pred_fallthru
          _
        // Predicated region
        $region21: #{tpu_custom_call.1} parent=15 // pred_check
          %p153 = pneg %p77
        $region22: #{tpu_custom_call.1} parent=15 // pred_check_branch
          %155 = sbr.rel (%p153) target = $region24
        $region23: #{tpu_custom_call.1} parent=15 // pred_region
          %s156 = sand.u32 %s67, 1
          %s157 = scalar_lea.sflag [#allocation6], %s156
          %s158 = sand.u32 %s67, 1
          %s159 = smul.addr %s158, 16
          %s160 = scalar_lea.vmem [#allocation5], %s159
          %s162 = ssub.s32 256, 256
          %163 = vsyncadd %s157, %s162
          %s164 = smul.addr %s25, 2
          %s165 = smul.addr %s164, 128
          %s166 = scalar_lea.hbm %s1, %s165
          %s167 = sshll.u32 %s160, 4
          %s168 = int_to_ptr.vmem [resolvable:$true] %s167
          %173 = dma.hbm_to_vmem [thread:$0]  %s166, 256, %s168, %s157, 128, 128, 8
        $region24: #{tpu_custom_call.1} parent=15 // pred_fallthru
          _
      $region16: #{tpu_custom_call.1} parent=5 // pred_fallthru
        _
      %p174 = scmp.le.s32.totalorder 1, %s17
      %p175 = scmp.lt.s32.totalorder %s17, 3
      %p176 = pnand %p174, %p175
      %p177 = pneg %p176
      // Predicated region
      $region25: #{tpu_custom_call.1} parent=5 // pred_check
        _
      $region26: #{tpu_custom_call.1} parent=5 // pred_check_branch
        %179 = sbr.rel (%p176) target = $region28
      $region27: #{tpu_custom_call.1} parent=5 // pred_region
        %s180 = ssub.s32 %s17, 1
        %s181 = sand.u32 %s44, 1
        %s182 = scalar_lea.sflag [#allocation3], %s181
        %s183 = sand.u32 %s44, 1
        %s184 = smul.addr %s183, 64
        %s185 = scalar_lea.vmem [#allocation2], %s184
        // Predicated region
        $region29: #{tpu_custom_call.1} parent=27 // pred_check
          %p186 = pneg %p57
        $region30: #{tpu_custom_call.1} parent=27 // pred_check_branch
          %188 = sbr.rel (%p186) target = $region32
        $region31: #{tpu_custom_call.1} parent=27 // pred_region
          %189 = dma.done %s182, 1024
        $region32: #{tpu_custom_call.1} parent=27 // pred_fallthru
          _
        %s190 = sand.u32 %s70, 1
        %s191 = scalar_lea.sflag [#allocation6], %s190
        %s192 = sand.u32 %s70, 1
        %s193 = smul.addr %s192, 16
        %s194 = scalar_lea.vmem [#allocation5], %s193
        // Predicated region
        $region33: #{tpu_custom_call.1} parent=27 // pred_check
          %p195 = pneg %p83
        $region34: #{tpu_custom_call.1} parent=27 // pred_check_branch
          %197 = sbr.rel (%p195) target = $region36
        $region35: #{tpu_custom_call.1} parent=27 // pred_region
          %198 = dma.done %s191, 256
        $region36: #{tpu_custom_call.1} parent=27 // pred_fallthru
          _
        %s199 = sand.u32 %s44, 1
        %s200 = scalar_lea.sflag [#allocation3], %s199
        %s201 = sand.u32 %s44, 1
        %s202 = smul.addr %s201, 64
        %s203 = scalar_lea.vmem [#allocation2], %s202
        %p204 = pneg %p57
        %p205 = pneg %p54
        %s206 = sand.u32 %s70, 1
        %s207 = scalar_lea.sflag [#allocation6], %s206
        %s208 = sand.u32 %s70, 1
        %s209 = smul.addr %s208, 16
        %s210 = scalar_lea.vmem [#allocation5], %s209
        %p211 = pneg %p83
        %p212 = pneg %p80
        %p213 = pneg %p111
        %p214 = pneg %p108
        %s215 = sand.u32 %s98, 1
        %s216 = scalar_lea.sflag [#allocation4], %s215
        %s217 = sand.u32 %s98, 1
        %s218 = smul.addr %s217, 32
        %s219 = scalar_lea.vmem [#allocation7], %s218
        %s220 = smul.u32 2, %s26
        %s221 = smul.u32 2, %s26
        %v222 = vld [vmem:[%s194] sm:$0xff]
        %v223 = vld [vmem:[%s194 + $0x8] sm:$0xff]
        %v224 = vld [vmem:[%s185] sm:$0xff]
        %v225 = vld [vmem:[%s185 + $0x8] sm:$0xff]
        %v226 = vld [vmem:[%s185 + $0x10] sm:$0xff]
        %v227 = vld [vmem:[%s185 + $0x18] sm:$0xff]
        %v228 = vld [vmem:[%s185 + $0x20] sm:$0xff]
        %v229 = vld [vmem:[%s185 + $0x28] sm:$0xff]
        %v230 = vld [vmem:[%s185 + $0x30] sm:$0xff]
        %v231 = vld [vmem:[%s185 + $0x38] sm:$0xff]
        %vm232 = vcmask 261120
        %v234 = vsel %vm232, %v222, 0
        %v237 = vsel %vm232, %v223, 0
        %239 = vmatprep.subr.mxu0 0.0
        %240 = vmatpush1.msra.mxu0 0.0
        %241 = vmatprep.subr.mxu0 0.0
        %242 = vmatpush1.msra.mxu0 0.0
        %243 = vmatprep.subr.mxu0 0.0
        %244 = vmatpush1.msra.mxu0 0.0
        %245 = vmatprep.subr.mxu0 0.0
        %246 = vmatpush1.msra.mxu0 0.0
        %247 = vmatprep.subr.mxu0 0.0
        %248 = vmatpush1.msra.mxu0 0.0
        %249 = vmatprep.subr.mxu0 0.0
        %250 = vmatpush1.msra.mxu0 0.0
        %251 = vmatprep.subr.mxu0 0.0
        %252 = vmatpush1.msra.mxu0 0.0
        %253 = vmatprep.subr.mxu0 0.0
        %254 = vmatpush1.msra.mxu0 0.0
        %255 = vmatprep.subr.mxu0 0.0
        %256 = vmatpush1.msra.mxu0 0.0
        %257 = vmatprep.subr.mxu0 0.0
        %258 = vmatpush1.msra.mxu0 0.0
        %259 = vmatprep.subr.mxu0 0.0
        %260 = vmatpush1.msra.mxu0 0.0
        %261 = vmatprep.subr.mxu0 0.0
        %262 = vmatpush1.msra.mxu0 0.0
        %263 = vmatprep.subr.mxu0 %v231
        %264 = vmatpush1.msra.mxu0 %v230
        %265 = vmatprep.subr.mxu0 %v229
        %266 = vmatpush1.msra.mxu0 %v228
        %267 = vmatprep.subr.mxu0 %v227
        %268 = vmatpush1.msra.mxu0 %v226
        %269 = vmatprep.subr.mxu0 %v225
        %270 = vmatpush1.msra.mxu0 %v224
        %271 = vmatprep.subr.mxu0 0.0
        %272 = vmatpush2.msra.mxu0 0.0
        %273 = vmatprep.subr.mxu0 0.0
        %274 = vmatpush2.msra.mxu0 0.0
        %275 = vmatprep.subr.mxu0 0.0
        %276 = vmatpush2.msra.mxu0 0.0
        %277 = vmatprep.subr.mxu0 0.0
        %278 = vmatpush2.msra.mxu0 0.0
        %279 = vmatprep.subr.mxu0 0.0
        %280 = vmatpush2.msra.mxu0 0.0
        %281 = vmatprep.subr.mxu0 0.0
        %282 = vmatpush2.msra.mxu0 0.0
        %283 = vmatprep.subr.mxu0 0.0
        %284 = vmatpush2.msra.mxu0 0.0
        %285 = vmatprep.subr.mxu0 0.0
        %286 = vmatpush2.msra.mxu0 0.0
        %287 = vmatprep.subr.mxu0 0.0
        %288 = vmatpush2.msra.mxu0 0.0
        %289 = vmatprep.subr.mxu0 0.0
        %290 = vmatpush2.msra.mxu0 0.0
        %291 = vmatprep.subr.mxu0 0.0
        %292 = vmatpush2.msra.mxu0 0.0
        %293 = vmatprep.subr.mxu0 0.0
        %294 = vmatpush2.msra.mxu0 0.0
        %295 = vmatprep.subr.mxu0 0.0
        %296 = vmatpush2.msra.mxu0 0.0
        %297 = vmatprep.subr.mxu0 0.0
        %298 = vmatpush2.msra.mxu0 0.0
        %299 = vmatprep.subr.mxu0 0.0
        %300 = vmatpush2.msra.mxu0 0.0
        %301 = vmatprep.subr.mxu0 0.0
        %302 = vmatpush2.msra.mxu0 0.0
        %303 = vmatprep.mubr.f32.mxu0 0.0
        %304 = vmatmul.mubr.f32.gmra.mxu0 %v234
        %v305 = vpop.f32.mrf.mxu0
        %v306 = vadd.f32 0.0, %v305
        %v307 = vpop.f32.mrf.mxu0
        %v308 = vadd.f32 0.0, %v307
        %309 = vmatprep.mubr.f32.mxu0 0.0
        %310 = vmatmul.mubr.f32.gmra.mxu0 %v237
        %v311 = vpop.f32.mrf.mxu0
        %v312 = vadd.f32 0.0, %v311
        %v313 = vpop.f32.mrf.mxu0
        %v314 = vadd.f32 0.0, %v313
        %315 = vdwg.mxu0
        %316 = vst [vmem:[%s219] sm:$0xff] %v306
        %317 = vst [vmem:[%s219 + $0x8] sm:$0xff] %v308
        %318 = vst [vmem:[%s219 + $0x10] sm:$0xff] %v312
        %319 = vst [vmem:[%s219 + $0x18] sm:$0xff] %v314
        %s320 = sand.u32 %s98, 1
        %s321 = scalar_lea.sflag [#allocation4], %s320
        %s322 = sand.u32 %s98, 1
        %s323 = smul.addr %s322, 32
        %s324 = scalar_lea.vmem [#allocation7], %s323
        // Predicated region
        $region37: #{tpu_custom_call.1} parent=27 // pred_check
          %p325 = pneg %p108
        $region38: #{tpu_custom_call.1} parent=27 // pred_check_branch
          %327 = sbr.rel (%p325) target = $region40
        $region39: #{tpu_custom_call.1} parent=27 // pred_region
          %s328 = smul.u32 2, %s26
          %s330 = ssub.s32 512, 512
          %331 = vsyncadd %s321, %s330
          %s332 = smul.addr %s27, 4
          %s333 = sadd.s32 %s328, %s332
          %s334 = smul.addr %s333, 128
          %s335 = scalar_lea.hbm %s2, %s334
          %s336 = sshll.u32 %s324, 4
          %s337 = int_to_ptr.vmem [resolvable:$true] %s336
          %342 = dma.vmem_to_hbm [thread:$0]  %s337, 512, %s335, %s321, 256, 256, 16
        $region40: #{tpu_custom_call.1} parent=27 // pred_fallthru
          _
      $region28: #{tpu_custom_call.1} parent=5 // pred_fallthru
        _
      %p343 = scmp.le.s32.totalorder 2, %s17
      // Predicated region
      $region41: #{tpu_custom_call.1} parent=5 // pred_check
        %p344 = pneg %p343
      $region42: #{tpu_custom_call.1} parent=5 // pred_check_branch
        %346 = sbr.rel (%p344) target = $region44
      $region43: #{tpu_custom_call.1} parent=5 // pred_region
        %s347 = ssub.s32 %s17, 2
        // Predicated region
        $region45: #{tpu_custom_call.1} parent=43 // pred_check
          %p348 = pneg %p114
        $region46: #{tpu_custom_call.1} parent=43 // pred_check_branch
          %350 = sbr.rel (%p348) target = $region48
        $region47: #{tpu_custom_call.1} parent=43 // pred_region
          %s351 = sand.u32 %s99, 1
          %s352 = scalar_lea.sflag [#allocation4], %s351
          %s353 = sand.u32 %s99, 1
          %s354 = smul.addr %s353, 32
          %s355 = scalar_lea.vmem [#allocation7], %s354
          %356 = dma.done %s352, 512
        $region48: #{tpu_custom_call.1} parent=43 // pred_fallthru
          _
      $region44: #{tpu_custom_call.1} parent=5 // pred_fallthru
        _
    $region6: #{tpu_custom_call.1} parent=1 // loop_footer
      %s21 = sadd.s32 1, %s17
    $region7: #{tpu_custom_call.1} parent=1 // loop_footer_branch
      %16 = sbr.rel target = $region3
    $region8: #{tpu_custom_call.1} parent=1 // loop_exit
      _
    %357 = vsyncpa [#allocation3], 1
    %s358 = scalar_lea.sflag [#allocation3], 1
    %359 = vsyncpa %s358, 1
    %360 = vsyncpa [#allocation6], 1
    %s361 = scalar_lea.sflag [#allocation6], 1
    %362 = vsyncpa %s361, 1
    %363 = vsyncpa [#allocation4], 1
    %s364 = scalar_lea.sflag [#allocation4], 1
    %365 = vsyncpa %s364, 1

</llo_original>
